<compile_context>
chip_gen: v6e
topology: v6e:2x2x1
jax: 0.10.0
libtpu: 0.0.40
codegen_flags: <defaults>
</compile_context>

<pallas_src>
import functools

import jax
import jax.numpy as jnp
from jax.experimental import pallas as pl
from jax.experimental.pallas import tpu as pltpu

UNIT = 64            # hidden width of each head
WIDE = 2 * UNIT      # fused width (Q half | I half) == one full vreg lane width


def fc_q_kernel(x_ref, w_ref, out_ref, *, num_actions):
    """x_ref:   (Bp, 128) f32 state, zero-padded, with a 1.0 "bias lane" at
                column state_dim.
    w_ref:      (4, 128, 128) bf16 packed slab:
                  [0] layer-1 weights (fused Q|I, bias folded into row state_dim)
                  [1] layer-2 block-diagonal weights
                  [2] layer-3 block-diagonal weights, i-head columns duplicated
                      into lanes [H+A:H+2A)
                  [3] row 0 = layer-2 bias, row 1 = layer-3 bias (duplicated too)
    out_ref:    (Bp, 128) f32: q in [0:A), i in [H:H+A), log_softmax(i) in
                [H+A:H+2A), zeros elsewhere."""
    A = num_actions
    H = UNIT

    x = x_ref[...]                                         # (Bp, 128) f32

    # Layer-2/3 biases from the 4th slab slice (f32 for the VPU adds).
    b23 = w_ref[3, 0:2, :].astype(jnp.float32)             # (2, 128)
    b2 = b23[0:1, :]
    b3 = b23[1:2, :]

    # Layer 1 (fused Q|I). Bias enters through the ones-lane of x.
    h = jnp.dot(x.astype(jnp.bfloat16), w_ref[0],
                preferred_element_type=jnp.float32)
    h = jnp.maximum(h, 0.0)

    # Layer 2 (block-diagonal).
    h = jnp.dot(h.astype(jnp.bfloat16), w_ref[1],
                preferred_element_type=jnp.float32) + b2
    h = jnp.maximum(h, 0.0)

    # Layer 3 (block-diagonal; i-head replicated into the log-softmax lanes).
    z = jnp.dot(h.astype(jnp.bfloat16), w_ref[2],
                preferred_element_type=jnp.float32) + b3   # (Bp, 128)

    lane = jax.lax.broadcasted_iota(jnp.int32, z.shape, 1)
    i_region = (lane >= H) & (lane < H + A)                # logical i lanes
    ls_region = (lane >= H + A) & (lane < H + 2 * A)       # log_softmax lanes

    i_full = jnp.maximum(z, 0.0)                           # relu; masked later

    # Masked full-vreg log_softmax over the A logical i lanes only.
    m = jnp.max(jnp.where(i_region, i_full, -jnp.inf), axis=1, keepdims=True)
    esum = jnp.sum(jnp.exp(jnp.where(i_region, i_full - m, -jnp.inf)),
                   axis=1, keepdims=True)
    lse = jnp.log(esum)

    out = jnp.where(lane < H, z, 0.0)                      # q head (lanes >=A are 0)
    out = jnp.where(i_region, i_full, out)                 # i = relu(i3(...))
    out = jnp.where(ls_region, i_full - m - lse, out)      # log_softmax(i)
    out_ref[...] = out


def pack_params(params, state_dim, num_actions):
    """One-time wrapper-side packing of the 12 PyTorch-style tensors into a
    single (4, 128, 128) bf16 slab (weights + biases), exact zeros elsewhere."""
    H, W = UNIT, WIDE
    A = num_actions
    assert state_dim + 1 <= W, "need one spare lane for the folded layer-1 bias"
    assert H + 2 * A <= W, "q/i/log_softmax lanes must fit in one 128-lane vreg"

    w1 = jnp.zeros((W, W), jnp.float32)
    w1 = w1.at[:state_dim, :H].set(params["wq1"])
    w1 = w1.at[:state_dim, H:].set(params["wi1"])
    # Layer-1 bias folded into the weight row hit by the ones-lane of x.
    w1 = w1.at[state_dim, :H].set(params["bq1"][0])
    w1 = w1.at[state_dim, H:].set(params["bi1"][0])

    w2 = jnp.zeros((W, W), jnp.float32)
    w2 = w2.at[:H, :H].set(params["wq2"])
    w2 = w2.at[H:, H:].set(params["wi2"])

    w3 = jnp.zeros((W, W), jnp.float32)
    w3 = w3.at[:H, :A].set(params["wq3"])
    w3 = w3.at[H:, H:H + A].set(params["wi3"])
    w3 = w3.at[H:, H + A:H + 2 * A].set(params["wi3"])     # duplicate -> logsm lanes

    b2 = (jnp.zeros((W,), jnp.float32)
          .at[:H].set(params["bq2"][0])
          .at[H:].set(params["bi2"][0]))
    b3 = (jnp.zeros((W,), jnp.float32)
          .at[:A].set(params["bq3"][0])
          .at[H:H + A].set(params["bi3"][0])
          .at[H + A:H + 2 * A].set(params["bi3"][0]))
    bias = jnp.zeros((W, W), jnp.float32).at[0].set(b2).at[1].set(b3)

    return jnp.stack([w1, w2, w3, bias]).astype(jnp.bfloat16)   # (4, 128, 128)


def fc_q_forward(state, w_slab, *, num_actions):
    """state: (B, state_dim) f32. Returns (q3(q), log_softmax(i), i)."""
    B, state_dim = state.shape
    A = num_actions
    H = UNIT
    Bp = max(8, ((B + 7) // 8) * 8)      # whole 8-sublane vreg granule

    # Lane-dense state operand: padded columns/rows hit zero weight rows;
    # column `state_dim` is the ones-lane that injects the layer-1 bias.
    x = jnp.zeros((Bp, WIDE), jnp.float32)
    x = x.at[:B, :state_dim].set(state)
    x = x.at[:B, state_dim].set(1.0)

    vmem = pl.BlockSpec(memory_space=pltpu.MemorySpace.VMEM)
    out = pl.pallas_call(
        functools.partial(fc_q_kernel, num_actions=A),
        out_shape=jax.ShapeDtypeStruct((Bp, WIDE), jnp.float32),
        in_specs=[vmem, vmem],
        out_specs=vmem,
    )(x, w_slab)

    q = out[:B, :A]
    i = out[:B, H:H + A]
    logsm = out[:B, H + A:H + 2 * A]
    return q, logsm, i


def init_params(key, state_dim, num_actions):
    """Deterministic init mimicking PyTorch's default U(-1/sqrt(fan_in), 1/sqrt(fan_in)).
    Weights stored as (in_features, out_features); biases as (1, out_features)."""
    dims = {
        "q1": (state_dim, UNIT), "q2": (UNIT, UNIT), "q3": (UNIT, num_actions),
        "i1": (state_dim, UNIT), "i2": (UNIT, UNIT), "i3": (UNIT, num_actions),
    }
    params = {}
    keys = jax.random.split(key, 2 * len(dims))
    for idx, (name, (fan_in, fan_out)) in enumerate(dims.items()):
        bound = 1.0 / jnp.sqrt(float(fan_in))
        wk, bk = keys[2 * idx], keys[2 * idx + 1]
        params["w" + name] = jax.random.uniform(
            wk, (fan_in, fan_out), jnp.float32, -bound, bound)
        params["b" + name] = jax.random.uniform(
            bk, (1, fan_out), jnp.float32, -bound, bound)
    return params


def fc_q_reference(state, p):
    """Pure-JAX f32 reference of the PyTorch forward."""
    q = jax.nn.relu(state @ p["wq1"] + p["bq1"])
    q = jax.nn.relu(q @ p["wq2"] + p["bq2"])
    q_out = q @ p["wq3"] + p["bq3"]
    i = jax.nn.relu(state @ p["wi1"] + p["bi1"])
    i = jax.nn.relu(i @ p["wi2"] + p["bi2"])
    i = jax.nn.relu(i @ p["wi3"] + p["bi3"])
    return q_out, jax.nn.log_softmax(i, axis=1), i


if __name__ == "__main__":
    B, STATE_DIM, NUM_ACTIONS = 4, 10, 6

    key = jax.random.PRNGKey(0)
    pkey, skey = jax.random.split(key)
    params = init_params(pkey, STATE_DIM, NUM_ACTIONS)
    state = jax.random.normal(skey, (B, STATE_DIM), jnp.float32)

    # One-time packing (wrapper side): single bf16 weight+bias slab.
    w_slab = pack_params(params, STATE_DIM, NUM_ACTIONS)

    q_out, logsm_out, i_out = fc_q_forward(state, w_slab, num_actions=NUM_ACTIONS)
    jax.block_until_ready((q_out, logsm_out, i_out))

    # bf16 MXU operands -> relaxed tolerance vs the f32 reference.
    q_ref, logsm_ref, i_ref = fc_q_reference(state, params)
    assert jnp.allclose(q_out, q_ref, atol=3e-2, rtol=3e-2)
    assert jnp.allclose(logsm_out, logsm_ref, atol=3e-2, rtol=3e-2)
    assert jnp.allclose(i_out, i_ref, atol=3e-2, rtol=3e-2)

    print("KERNEL_OK")
</pallas_src>

<mosaic_0001>
module attributes {stable_mosaic.version = 11 : i64} {
  func.func @fc_q_kernel(%arg0: memref<8x128xf32, #tpu.memory_space<vmem>>, %arg1: memref<4x128x128xbf16, #tpu.memory_space<vmem>>, %arg2: memref<8x128xf32, #tpu.memory_space<vmem>>) attributes {dimension_semantics = [], scalar_prefetch = 0 : i64, scratch_operands = 0 : i64, tpu.core_type = #tpu.core_type<tc>} {
    %c0 = arith.constant 0 : index
    %c0_0 = arith.constant 0 : index
    %0 = vector.load %arg0[%c0, %c0_0] : memref<8x128xf32, #tpu.memory_space<vmem>>, vector<8x128xf32>
    %c3 = arith.constant 3 : index
    %c0_1 = arith.constant 0 : index
    %c0_2 = arith.constant 0 : index
    %1 = vector.load %arg1[%c3, %c0_1, %c0_2] : memref<4x128x128xbf16, #tpu.memory_space<vmem>>, vector<1x2x128xbf16>
    %2 = vector.shape_cast %1 : vector<1x2x128xbf16> to vector<2x128xbf16>
    %3 = arith.extf %2 : vector<2x128xbf16> to vector<2x128xf32>
    %4 = vector.extract_strided_slice %3 {offsets = [0, 0], sizes = [1, 128], strides = [1, 1]} : vector<2x128xf32> to vector<1x128xf32>
    %5 = vector.extract_strided_slice %3 {offsets = [1, 0], sizes = [1, 128], strides = [1, 1]} : vector<2x128xf32> to vector<1x128xf32>
    %6 = arith.truncf %0 : vector<8x128xf32> to vector<8x128xbf16>
    %c0_3 = arith.constant 0 : index
    %c0_4 = arith.constant 0 : index
    %c0_5 = arith.constant 0 : index
    %7 = vector.load %arg1[%c0_3, %c0_4, %c0_5] : memref<4x128x128xbf16, #tpu.memory_space<vmem>>, vector<1x128x128xbf16>
    %8 = vector.shape_cast %7 : vector<1x128x128xbf16> to vector<128x128xbf16>
    %cst = arith.constant dense<0.000000e+00> : vector<8x128xf32>
    %9 = tpu.matmul %6, %8, %cst {dimension_numbers = #tpu.dot_dimension_numbers<[1], [0], [0], [1], [0, 0, 1, 1], [], []>} : vector<8x128xbf16>, vector<128x128xbf16>, vector<8x128xf32> -> vector<8x128xf32>
    %cst_6 = arith.constant 0.000000e+00 : f32
    %10 = vector.broadcast %cst_6 : f32 to vector<8x128xf32>
    %11 = arith.maximumf %9, %10 : vector<8x128xf32>
    %12 = arith.truncf %11 : vector<8x128xf32> to vector<8x128xbf16>
    %c1 = arith.constant 1 : index
    %c0_7 = arith.constant 0 : index
    %c0_8 = arith.constant 0 : index
    %13 = vector.load %arg1[%c1, %c0_7, %c0_8] : memref<4x128x128xbf16, #tpu.memory_space<vmem>>, vector<1x128x128xbf16>
    %14 = vector.shape_cast %13 : vector<1x128x128xbf16> to vector<128x128xbf16>
    %cst_9 = arith.constant dense<0.000000e+00> : vector<8x128xf32>
    %15 = tpu.matmul %12, %14, %cst_9 {dimension_numbers = #tpu.dot_dimension_numbers<[1], [0], [0], [1], [0, 0, 1, 1], [], []>} : vector<8x128xbf16>, vector<128x128xbf16>, vector<8x128xf32> -> vector<8x128xf32>
    %16 = vector.broadcast %4 : vector<1x128xf32> to vector<8x128xf32>
    %17 = arith.addf %15, %16 : vector<8x128xf32>
    %cst_10 = arith.constant 0.000000e+00 : f32
    %18 = vector.broadcast %cst_10 : f32 to vector<8x128xf32>
    %19 = arith.maximumf %17, %18 : vector<8x128xf32>
    %20 = arith.truncf %19 : vector<8x128xf32> to vector<8x128xbf16>
    %c2 = arith.constant 2 : index
    %c0_11 = arith.constant 0 : index
    %c0_12 = arith.constant 0 : index
    %21 = vector.load %arg1[%c2, %c0_11, %c0_12] : memref<4x128x128xbf16, #tpu.memory_space<vmem>>, vector<1x128x128xbf16>
    %22 = vector.shape_cast %21 : vector<1x128x128xbf16> to vector<128x128xbf16>
    %cst_13 = arith.constant dense<0.000000e+00> : vector<8x128xf32>
    %23 = tpu.matmul %20, %22, %cst_13 {dimension_numbers = #tpu.dot_dimension_numbers<[1], [0], [0], [1], [0, 0, 1, 1], [], []>} : vector<8x128xbf16>, vector<128x128xbf16>, vector<8x128xf32> -> vector<8x128xf32>
    %24 = vector.broadcast %5 : vector<1x128xf32> to vector<8x128xf32>
    %25 = arith.addf %23, %24 : vector<8x128xf32>
    %26 = tpu.iota {dimensions = array<i32: 1>} : vector<8x128xi32>
    %c64_i32 = arith.constant 64 : i32
    %27 = vector.broadcast %c64_i32 : i32 to vector<8x128xi32>
    %28 = arith.cmpi sge, %26, %27 : vector<8x128xi32>
    %c70_i32 = arith.constant 70 : i32
    %29 = vector.broadcast %c70_i32 : i32 to vector<8x128xi32>
    %30 = arith.cmpi slt, %26, %29 : vector<8x128xi32>
    %31 = arith.andi %28, %30 : vector<8x128xi1>
    %c70_i32_14 = arith.constant 70 : i32
    %32 = vector.broadcast %c70_i32_14 : i32 to vector<8x128xi32>
    %33 = arith.cmpi sge, %26, %32 : vector<8x128xi32>
    %c76_i32 = arith.constant 76 : i32
    %34 = vector.broadcast %c76_i32 : i32 to vector<8x128xi32>
    %35 = arith.cmpi slt, %26, %34 : vector<8x128xi32>
    %36 = arith.andi %33, %35 : vector<8x128xi1>
    %cst_15 = arith.constant 0.000000e+00 : f32
    %37 = vector.broadcast %cst_15 : f32 to vector<8x128xf32>
    %38 = arith.maximumf %25, %37 : vector<8x128xf32>
    %cst_16 = arith.constant 0xFF800000 : f32
    %39 = vector.broadcast %cst_16 : f32 to vector<8x128xf32>
    %40 = arith.select %31, %38, %39 : vector<8x128xi1>, vector<8x128xf32>
    %cst_17 = arith.constant dense<0xFF800000> : vector<8xf32>
    %41 = vector.multi_reduction <maximumf>, %40, %cst_17 [1] : vector<8x128xf32> to vector<8xf32>
    %42 = vector.shape_cast %41 : vector<8xf32> to vector<8x1xf32>
    %43 = vector.broadcast %42 : vector<8x1xf32> to vector<8x128xf32>
    %44 = arith.subf %38, %43 : vector<8x128xf32>
    %cst_18 = arith.constant 0xFF800000 : f32
    %45 = vector.broadcast %cst_18 : f32 to vector<8x128xf32>
    %46 = arith.select %31, %44, %45 : vector<8x128xi1>, vector<8x128xf32>
    %47 = math.exp %46 : vector<8x128xf32>
    %cst_19 = arith.constant dense<0.000000e+00> : vector<8xf32>
    %48 = vector.multi_reduction <add>, %47, %cst_19 [1] : vector<8x128xf32> to vector<8xf32>
    %49 = vector.shape_cast %48 : vector<8xf32> to vector<8x1xf32>
    %50 = math.log %49 : vector<8x1xf32>
    %c64_i32_20 = arith.constant 64 : i32
    %51 = vector.broadcast %c64_i32_20 : i32 to vector<8x128xi32>
    %52 = arith.cmpi slt, %26, %51 : vector<8x128xi32>
    %cst_21 = arith.constant 0.000000e+00 : f32
    %53 = vector.broadcast %cst_21 : f32 to vector<8x128xf32>
    %54 = arith.select %52, %25, %53 : vector<8x128xi1>, vector<8x128xf32>
    %55 = arith.select %31, %38, %54 : vector<8x128xi1>, vector<8x128xf32>
    %56 = vector.broadcast %42 : vector<8x1xf32> to vector<8x128xf32>
    %57 = arith.subf %38, %56 : vector<8x128xf32>
    %58 = vector.broadcast %50 : vector<8x1xf32> to vector<8x128xf32>
    %59 = arith.subf %57, %58 : vector<8x128xf32>
    %60 = arith.select %36, %59, %55 : vector<8x128xi1>, vector<8x128xf32>
    %c0_22 = arith.constant 0 : index
    %c0_23 = arith.constant 0 : index
    %61 = vector.load %arg2[%c0_22, %c0_23] : memref<8x128xf32, #tpu.memory_space<vmem>>, vector<8x128xf32>
    tpu.vector_store %arg2[%c0_22, %c0_23], %60 {strides = array<i32>} : memref<8x128xf32, #tpu.memory_space<vmem>>, vector<8x128xf32>,
    return
  }
}

</mosaic_0001>

<llo_original>
// kernel: tpu_custom_call.1
$region0: #{tpu_custom_call.1}
  #allocation0 [shape = 'u32[]', space=smem, size = 0x4, offset = 0x4, fixed_abs, tag = 'smem constant byte address 0x4 - core index']
  #allocation1 [shape = 'u32[144,128]{1,0:T(1,128)}', space=vmem, size = 0x12000, scoped, tag = 'internal scratch']
  %s0 = inlined_call_operand.hbm [shape: f32[8,128], index: 0, kind: input, shape index: {}]
  %s1 = inlined_call_operand.hbm [shape: bf16[4,128,128], index: 1, kind: input, shape index: {}]
  %s2 = inlined_call_operand.hbm [shape: f32[8,128], index: 2, kind: output, shape index: {}]
  %s3 = sld [smem:[#allocation0]]
  $region26: #{tpu_custom_call.1} parent=0
    _
  %s5 = ssub.s32 1, %s3
  %s6 = scalar_select 0, %s5, %s3
  $region1: #{tpu_custom_call.1} parent=0
    #allocation2 [shape = 'u8[4096]{0}', space=vmem, size = 0x1000, scoped, tag = 'input window, operand 0, single buffered']
    #allocation3 [shape = 's32[1]{0}', space=sflag, size = 0x4, scoped, tag = 'scoped memory for tpu_custom_call.1']
    #allocation4 [shape = 's32[1]{0}', space=sflag, size = 0x4, scoped, tag = 'scoped memory for tpu_custom_call.1']
    #allocation5 [shape = 'u8[131072]{0}', space=vmem, size = 0x20000, scoped, tag = 'input window, operand 1, single buffered']
    #allocation6 [shape = 's32[1]{0}', space=sflag, size = 0x4, scoped, tag = 'scoped memory for tpu_custom_call.1']
    #allocation7 [shape = 'u8[4096]{0}', space=vmem, size = 0x1000, scoped, tag = 'output window, operand 0, single buffered']
    %7 = vsyncpa [#allocation3], 0
    %8 = vsyncpa [#allocation6], 0
    %9 = vsyncpa [#allocation4], 0
    // Predicated region
    $region2: #{tpu_custom_call.1} parent=1 // pred_check
      _
    $region3: #{tpu_custom_call.1} parent=1 // pred_check_branch
      %11 = sbr.rel (0) target = $region5
    $region4: #{tpu_custom_call.1} parent=1 // pred_region
      %s13 = ssub.s32 128, 128
      %14 = vsyncadd [#allocation3], %s13
      %s16 = sshll.u32 [#allocation2], 4
      %s17 = int_to_ptr.vmem [resolvable:$true] %s16
      %19 = dma.hbm_to_vmem [thread:$0]  %s0, 128, %s17, [#allocation3]
    $region5: #{tpu_custom_call.1} parent=1 // pred_fallthru
      _
    // Predicated region
    $region6: #{tpu_custom_call.1} parent=1 // pred_check
      _
    $region7: #{tpu_custom_call.1} parent=1 // pred_check_branch
      %21 = sbr.rel (0) target = $region9
    $region8: #{tpu_custom_call.1} parent=1 // pred_region
      %s23 = ssub.s32 4096, 4096
      %24 = vsyncadd [#allocation6], %s23
      %s25 = sshll.u32 [#allocation5], 4
      %s26 = int_to_ptr.vmem [resolvable:$true] %s25
      %31 = dma.hbm_to_vmem [thread:$0]  %s1, 4096, %s26, [#allocation6], 64, 64, 4
    $region9: #{tpu_custom_call.1} parent=1 // pred_fallthru
      _
    // Predicated region
    $region10: #{tpu_custom_call.1} parent=1 // pred_check
      _
    $region11: #{tpu_custom_call.1} parent=1 // pred_check_branch
      %33 = sbr.rel (0) target = $region13
    $region12: #{tpu_custom_call.1} parent=1 // pred_region
      %34 = dma.done [#allocation3], 128
    $region13: #{tpu_custom_call.1} parent=1 // pred_fallthru
      _
    // Predicated region
    $region14: #{tpu_custom_call.1} parent=1 // pred_check
      _
    $region15: #{tpu_custom_call.1} parent=1 // pred_check_branch
      %36 = sbr.rel (0) target = $region17
    $region16: #{tpu_custom_call.1} parent=1 // pred_region
      %37 = dma.done [#allocation6], 4096
    $region17: #{tpu_custom_call.1} parent=1 // pred_fallthru
      _
    %v39 = vld [vmem:[#allocation2] sm:$0xff]
    %s40 = scalar_lea.vmem [#allocation5], 192
    %v41 = vld [vmem:[%s40] sm:$0x1]
    %v42 = vunpack.c.l.bf16 %v41
    %v43 = vpack.c.bf16 %v39, %v39
    %v44 = vld [vmem:[#allocation5] sm:$0xf]
    %v45 = vld [vmem:[#allocation5 + $0x4] sm:$0xf]
    %v46 = vld [vmem:[#allocation5 + $0x8] sm:$0xf]
    %v47 = vld [vmem:[#allocation5 + $0xc] sm:$0xf]
    %v48 = vld [vmem:[#allocation5 + $0x10] sm:$0xf]
    %v49 = vld [vmem:[#allocation5 + $0x14] sm:$0xf]
    %v50 = vld [vmem:[#allocation5 + $0x18] sm:$0xf]
    %v51 = vld [vmem:[#allocation5 + $0x1c] sm:$0xf]
    %v52 = vld [vmem:[#allocation5 + $0x20] sm:$0xf]
    %v53 = vld [vmem:[#allocation5 + $0x24] sm:$0xf]
    %v54 = vld [vmem:[#allocation5 + $0x28] sm:$0xf]
    %v55 = vld [vmem:[#allocation5 + $0x2c] sm:$0xf]
    %v56 = vld [vmem:[#allocation5 + $0x30] sm:$0xf]
    %v57 = vld [vmem:[#allocation5 + $0x34] sm:$0xf]
    %v58 = vld [vmem:[#allocation5 + $0x38] sm:$0xf]
    %v59 = vld [vmem:[#allocation5 + $0x3c] sm:$0xf]
    %v76 = vunpack.c.l.b16 %v44
    %v77 = vunpack.c.l.b16 %v45
    %v78 = vunpack.c.l.b16 %v46
    %v79 = vunpack.c.l.b16 %v47
    %v80 = vunpack.c.l.b16 %v48
    %v81 = vunpack.c.l.b16 %v49
    %v82 = vunpack.c.l.b16 %v50
    %v83 = vunpack.c.l.b16 %v51
    %v84 = vunpack.c.l.b16 %v52
    %v85 = vunpack.c.l.b16 %v53
    %v86 = vunpack.c.l.b16 %v54
    %v87 = vunpack.c.l.b16 %v55
    %v88 = vunpack.c.l.b16 %v56
    %v89 = vunpack.c.l.b16 %v57
    %v90 = vunpack.c.l.b16 %v58
    %v91 = vunpack.c.l.b16 %v59
    %v92 = vpack.c.b16 %v77, %v76
    %v93 = vpack.c.b16 %v79, %v78
    %v94 = vpack.c.b16 %v81, %v80
    %v95 = vpack.c.b16 %v83, %v82
    %v96 = vpack.c.b16 %v85, %v84
    %v97 = vpack.c.b16 %v87, %v86
    %v98 = vpack.c.b16 %v89, %v88
    %v99 = vpack.c.b16 %v91, %v90
    %108 = vmatprep.subr.bf16.mxu0 0
    %109 = vmatpush1.bf16.msra.mxu0 %v99
    %110 = vmatprep.subr.bf16.mxu0 0
    %111 = vmatpush1.bf16.msra.mxu0 %v98
    %112 = vmatprep.subr.bf16.mxu0 0
    %113 = vmatpush1.bf16.msra.mxu0 %v97
    %114 = vmatprep.subr.bf16.mxu0 0
    %115 = vmatpush1.bf16.msra.mxu0 %v96
    %116 = vmatprep.subr.bf16.mxu0 0
    %117 = vmatpush1.bf16.msra.mxu0 %v95
    %118 = vmatprep.subr.bf16.mxu0 0
    %119 = vmatpush1.bf16.msra.mxu0 %v94
    %120 = vmatprep.subr.bf16.mxu0 0
    %121 = vmatpush1.bf16.msra.mxu0 %v93
    %122 = vmatprep.subr.bf16.mxu0 0
    %123 = vmatpush1.bf16.msra.mxu0 %v92
    %124 = vmatprep.subr.bf16.mxu0 0
    %125 = vmatpush2.bf16.msra.mxu0 0
    %126 = vmatprep.subr.bf16.mxu0 0
    %127 = vmatpush2.bf16.msra.mxu0 0
    %128 = vmatprep.subr.bf16.mxu0 0
    %129 = vmatpush2.bf16.msra.mxu0 0
    %130 = vmatprep.subr.bf16.mxu0 0
    %131 = vmatpush2.bf16.msra.mxu0 0
    %132 = vmatprep.subr.bf16.mxu0 0
    %133 = vmatpush2.bf16.msra.mxu0 0
    %134 = vmatprep.subr.bf16.mxu0 0
    %135 = vmatpush2.bf16.msra.mxu0 0
    %136 = vmatprep.subr.bf16.mxu0 0
    %137 = vmatpush2.bf16.msra.mxu0 0
    %138 = vmatprep.subr.bf16.mxu0 0
    %139 = vmatpush2.bf16.msra.mxu0 0
    %140 = vmatprep.mubr.bf16.mxu0 0
    %141 = vmatmul.mubr.bf16.gmra.mxu0 %v43
    %v142 = vpop.f32.mrf.mxu0
    %v143 = vadd.f32 0.0, %v142
    %v144 = vpop.f32.mrf.mxu0
    %v145 = vpop.f32.mrf.mxu0
    %v146 = vpop.f32.mrf.mxu0
    %147 = vdwg.mxu0
    %v148 = vmax.f32 %v143, 0.0
    %v149 = vpack.c.bf16 %v148, %v148
    %s150 = scalar_lea.vmem [#allocation5], 64
    %v151 = vld [vmem:[%s150] sm:$0xf]
    %v152 = vld [vmem:[%s150 + $0x4] sm:$0xf]
    %v153 = vld [vmem:[%s150 + $0x8] sm:$0xf]
    %v154 = vld [vmem:[%s150 + $0xc] sm:$0xf]
    %v155 = vld [vmem:[%s150 + $0x10] sm:$0xf]
    %v156 = vld [vmem:[%s150 + $0x14] sm:$0xf]
    %v157 = vld [vmem:[%s150 + $0x18] sm:$0xf]
    %v158 = vld [vmem:[%s150 + $0x1c] sm:$0xf]
    %v159 = vld [vmem:[%s150 + $0x20] sm:$0xf]
    %v160 = vld [vmem:[%s150 + $0x24] sm:$0xf]
    %v161 = vld [vmem:[%s150 + $0x28] sm:$0xf]
    %v162 = vld [vmem:[%s150 + $0x2c] sm:$0xf]
    %v163 = vld [vmem:[%s150 + $0x30] sm:$0xf]
    %v164 = vld [vmem:[%s150 + $0x34] sm:$0xf]
    %v165 = vld [vmem:[%s150 + $0x38] sm:$0xf]
    %v166 = vld [vmem:[%s150 + $0x3c] sm:$0xf]
    %v167 = vlaneseq
    %v168 = vshrl.u32 %v167, 7
    %v169 = vsub.s32 0, %v168
    %v170 = vrot.slane %v42, %v169
    %v187 = vunpack.c.l.b16 %v151
    %v188 = vunpack.c.l.b16 %v152
    %v189 = vunpack.c.l.b16 %v153
    %v190 = vunpack.c.l.b16 %v154
    %v191 = vunpack.c.l.b16 %v155
    %v192 = vunpack.c.l.b16 %v156
    %v193 = vunpack.c.l.b16 %v157
    %v194 = vunpack.c.l.b16 %v158
    %v195 = vunpack.c.l.b16 %v159
    %v196 = vunpack.c.l.b16 %v160
    %v197 = vunpack.c.l.b16 %v161
    %v198 = vunpack.c.l.b16 %v162
    %v199 = vunpack.c.l.b16 %v163
    %v200 = vunpack.c.l.b16 %v164
    %v201 = vunpack.c.l.b16 %v165
    %v202 = vunpack.c.l.b16 %v166
    %v203 = vpack.c.b16 %v188, %v187
    %v204 = vpack.c.b16 %v190, %v189
    %v205 = vpack.c.b16 %v192, %v191
    %v206 = vpack.c.b16 %v194, %v193
    %v207 = vpack.c.b16 %v196, %v195
    %v208 = vpack.c.b16 %v198, %v197
    %v209 = vpack.c.b16 %v200, %v199
    %v210 = vpack.c.b16 %v202, %v201
    %219 = vmatprep.subr.bf16.mxu0 0
    %220 = vmatpush1.bf16.msra.mxu0 %v210
    %221 = vmatprep.subr.bf16.mxu0 0
    %222 = vmatpush1.bf16.msra.mxu0 %v209
    %223 = vmatprep.subr.bf16.mxu0 0
    %224 = vmatpush1.bf16.msra.mxu0 %v208
    %225 = vmatprep.subr.bf16.mxu0 0
    %226 = vmatpush1.bf16.msra.mxu0 %v207
    %227 = vmatprep.subr.bf16.mxu0 0
    %228 = vmatpush1.bf16.msra.mxu0 %v206
    %229 = vmatprep.subr.bf16.mxu0 0
    %230 = vmatpush1.bf16.msra.mxu0 %v205
    %231 = vmatprep.subr.bf16.mxu0 0
    %232 = vmatpush1.bf16.msra.mxu0 %v204
    %233 = vmatprep.subr.bf16.mxu0 0
    %234 = vmatpush1.bf16.msra.mxu0 %v203
    %235 = vmatprep.subr.bf16.mxu0 0
    %236 = vmatpush2.bf16.msra.mxu0 0
    %237 = vmatprep.subr.bf16.mxu0 0
    %238 = vmatpush2.bf16.msra.mxu0 0
    %239 = vmatprep.subr.bf16.mxu0 0
    %240 = vmatpush2.bf16.msra.mxu0 0
    %241 = vmatprep.subr.bf16.mxu0 0
    %242 = vmatpush2.bf16.msra.mxu0 0
    %243 = vmatprep.subr.bf16.mxu0 0
    %244 = vmatpush2.bf16.msra.mxu0 0
    %245 = vmatprep.subr.bf16.mxu0 0
    %246 = vmatpush2.bf16.msra.mxu0 0
    %247 = vmatprep.subr.bf16.mxu0 0
    %248 = vmatpush2.bf16.msra.mxu0 0
    %249 = vmatprep.subr.bf16.mxu0 0
    %250 = vmatpush2.bf16.msra.mxu0 0
    %251 = vmatprep.mubr.bf16.mxu0 0
    %252 = vmatmul.mubr.bf16.gmra.mxu0 %v149
    %v253 = vpop.f32.mrf.mxu0
    %v254 = vadd.f32 %v170, %v253
    %v255 = vpop.f32.mrf.mxu0
    %v256 = vpop.f32.mrf.mxu0
    %v257 = vpop.f32.mrf.mxu0
    %258 = vdwg.mxu0
    %v259 = vmax.f32 %v254, 0.0
    %v260 = vpack.c.bf16 %v259, %v259
    %s261 = scalar_lea.vmem [#allocation5], 128
    %v262 = vld [vmem:[%s261] sm:$0xf]
    %v263 = vld [vmem:[%s261 + $0x4] sm:$0xf]
    %v264 = vld [vmem:[%s261 + $0x8] sm:$0xf]
    %v265 = vld [vmem:[%s261 + $0xc] sm:$0xf]
    %v266 = vld [vmem:[%s261 + $0x10] sm:$0xf]
    %v267 = vld [vmem:[%s261 + $0x14] sm:$0xf]
    %v268 = vld [vmem:[%s261 + $0x18] sm:$0xf]
    %v269 = vld [vmem:[%s261 + $0x1c] sm:$0xf]
    %v270 = vld [vmem:[%s261 + $0x20] sm:$0xf]
    %v271 = vld [vmem:[%s261 + $0x24] sm:$0xf]
    %v272 = vld [vmem:[%s261 + $0x28] sm:$0xf]
    %v273 = vld [vmem:[%s261 + $0x2c] sm:$0xf]
    %v274 = vld [vmem:[%s261 + $0x30] sm:$0xf]
    %v275 = vld [vmem:[%s261 + $0x34] sm:$0xf]
    %v276 = vld [vmem:[%s261 + $0x38] sm:$0xf]
    %v277 = vld [vmem:[%s261 + $0x3c] sm:$0xf]
    %v278 = vlaneseq
    %v279 = vshrl.u32 %v278, 7
    %v280 = vsub.s32 1, %v279
    %v281 = vrot.slane %v42, %v280
    %v298 = vunpack.c.l.b16 %v262
    %v299 = vunpack.c.l.b16 %v263
    %v300 = vunpack.c.l.b16 %v264
    %v301 = vunpack.c.l.b16 %v265
    %v302 = vunpack.c.l.b16 %v266
    %v303 = vunpack.c.l.b16 %v267
    %v304 = vunpack.c.l.b16 %v268
    %v305 = vunpack.c.l.b16 %v269
    %v306 = vunpack.c.l.b16 %v270
    %v307 = vunpack.c.l.b16 %v271
    %v308 = vunpack.c.l.b16 %v272
    %v309 = vunpack.c.l.b16 %v273
    %v310 = vunpack.c.l.b16 %v274
    %v311 = vunpack.c.l.b16 %v275
    %v312 = vunpack.c.l.b16 %v276
    %v313 = vunpack.c.l.b16 %v277
    %v314 = vpack.c.b16 %v299, %v298
    %v315 = vpack.c.b16 %v301, %v300
    %v316 = vpack.c.b16 %v303, %v302
    %v317 = vpack.c.b16 %v305, %v304
    %v318 = vpack.c.b16 %v307, %v306
    %v319 = vpack.c.b16 %v309, %v308
    %v320 = vpack.c.b16 %v311, %v310
    %v321 = vpack.c.b16 %v313, %v312
    %330 = vmatprep.subr.bf16.mxu0 0
    %331 = vmatpush1.bf16.msra.mxu0 %v321
    %332 = vmatprep.subr.bf16.mxu0 0
    %333 = vmatpush1.bf16.msra.mxu0 %v320
    %334 = vmatprep.subr.bf16.mxu0 0
    %335 = vmatpush1.bf16.msra.mxu0 %v319
    %336 = vmatprep.subr.bf16.mxu0 0
    %337 = vmatpush1.bf16.msra.mxu0 %v318
    %338 = vmatprep.subr.bf16.mxu0 0
    %339 = vmatpush1.bf16.msra.mxu0 %v317
    %340 = vmatprep.subr.bf16.mxu0 0
    %341 = vmatpush1.bf16.msra.mxu0 %v316
    %342 = vmatprep.subr.bf16.mxu0 0
    %343 = vmatpush1.bf16.msra.mxu0 %v315
    %344 = vmatprep.subr.bf16.mxu0 0
    %345 = vmatpush1.bf16.msra.mxu0 %v314
    %346 = vmatprep.subr.bf16.mxu0 0
    %347 = vmatpush2.bf16.msra.mxu0 0
    %348 = vmatprep.subr.bf16.mxu0 0
    %349 = vmatpush2.bf16.msra.mxu0 0
    %350 = vmatprep.subr.bf16.mxu0 0
    %351 = vmatpush2.bf16.msra.mxu0 0
    %352 = vmatprep.subr.bf16.mxu0 0
    %353 = vmatpush2.bf16.msra.mxu0 0
    %354 = vmatprep.subr.bf16.mxu0 0
    %355 = vmatpush2.bf16.msra.mxu0 0
    %356 = vmatprep.subr.bf16.mxu0 0
    %357 = vmatpush2.bf16.msra.mxu0 0
    %358 = vmatprep.subr.bf16.mxu0 0
    %359 = vmatpush2.bf16.msra.mxu0 0
    %360 = vmatprep.subr.bf16.mxu0 0
    %361 = vmatpush2.bf16.msra.mxu0 0
    %362 = vmatprep.mubr.bf16.mxu0 0
    %363 = vmatmul.mubr.bf16.gmra.mxu0 %v260
    %v364 = vpop.f32.mrf.mxu0
    %v365 = vadd.f32 %v281, %v364
    %v366 = vpop.f32.mrf.mxu0
    %v367 = vpop.f32.mrf.mxu0
    %v368 = vpop.f32.mrf.mxu0
    %369 = vdwg.mxu0
    %v370 = vlaneseq
    %v371 = vand.u32 %v370, 127
    %vm372 = vcmp.ge.s32.totalorder %v371, 64
    %vm373 = vcmp.lt.s32.totalorder %v371, 70
    %vm374 = vmand %vm372, %vm373
    %vm375 = vcmp.ge.s32.totalorder %v371, 70
    %vm376 = vcmp.lt.s32.totalorder %v371, 76
    %vm377 = vmand %vm375, %vm376
    %v378 = vmax.f32 %v365, 0.0
    %v379 = vsel %vm374, %v378, -inf
    %380 = vmax.xlane.f32.xlu0 %v379
    %v381 = vpop.xlane.xlu0 %380
    %v382 = vsub.f32 %v378, %v381
    %v383 = vsel %vm374, %v382, -inf
    %v384 = vmul.f32 %v383, 1.442695
    %v385 = vpow.pop %v384
    %386 = vadd.xlane.f32.xlu0 %v385
    %v387 = vpop.xlane.xlu0 %386
    %v388 = vlog2.pop %v387
    %v389 = vmul.f32 %v388, 0.6931472
    %vm390 = vcmp.lt.s32.totalorder %v371, 64
    %v391 = vsel %vm390, %v365, 0.0
    %v392 = vsel %vm374, %v378, %v391
    %v393 = vsub.f32 %v382, %v389
    %v394 = vsel %vm377, %v393, %v392
    %395 = vst [vmem:[#allocation7] sm:$0xff] %v394
    // Predicated region
    $region18: #{tpu_custom_call.1} parent=1 // pred_check
      _
    $region19: #{tpu_custom_call.1} parent=1 // pred_check_branch
      %397 = sbr.rel (0) target = $region21
    $region20: #{tpu_custom_call.1} parent=1 // pred_region
      %s399 = ssub.s32 128, 128
      %400 = vsyncadd [#allocation4], %s399
      %s402 = sshll.u32 [#allocation7], 4
      %s403 = int_to_ptr.vmem [resolvable:$true] %s402
      %405 = dma.vmem_to_hbm [thread:$0]  %s403, 128, %s2, [#allocation4]
    $region21: #{tpu_custom_call.1} parent=1 // pred_fallthru
      _
    // Predicated region
    $region22: #{tpu_custom_call.1} parent=1 // pred_check
      _
    $region23: #{tpu_custom_call.1} parent=1 // pred_check_branch
      %407 = sbr.rel (0) target = $region25
    $region24: #{tpu_custom_call.1} parent=1 // pred_region
      %408 = dma.done [#allocation4], 128
    $region25: #{tpu_custom_call.1} parent=1 // pred_fallthru
      _
    %409 = vsyncpa [#allocation3], 1
    %410 = vsyncpa [#allocation6], 1
    %411 = vsyncpa [#allocation4], 1

</llo_original>
